<compile_context>
chip_gen: v6e
topology: v6e:2x2x1
jax: 0.10.0
libtpu: 0.0.40
codegen_flags: <defaults>
</compile_context>

<pallas_src>
import jax
import jax.numpy as jnp
from jax.experimental import pallas as pl
from jax.experimental.pallas import tpu as pltpu

LN_EPS = 1e-5  # torch.nn.LayerNorm default


def _mlp_resnet_block_kernel(x_ref, gamma_ref, beta_ref,
                             w1_ref, b1_ref, w2_ref, b2_ref,
                             o_ref, h_ref, acc_ref):
    """One (tb, F) batch tile; the 4F hidden dim is processed in tk chunks (grid axis 1)."""
    k = pl.program_id(1)

    @pl.when(k == 0)
    def _init():
        x = x_ref[...].astype(jnp.float32)
        # TODO(synk): training-mode dropout not implemented (inference path: identity).
        # LayerNorm in f32; variance reuses the centered tensor (single pass).
        mean = jnp.mean(x, axis=-1, keepdims=True)
        xc = x - mean
        var = jnp.mean(xc * xc, axis=-1, keepdims=True)
        h = xc * jax.lax.rsqrt(var + LN_EPS)
        h = h * gamma_ref[...] + beta_ref[...]
        h_ref[...] = h.astype(jnp.bfloat16)        # cached MXU input, reused every k chunk
        acc_ref[...] = jnp.zeros_like(acc_ref)

    # fc1 chunk (F -> tk) -> ReLU -> fc2 chunk (tk -> F), accumulated in f32.
    h1 = jnp.dot(h_ref[...], w1_ref[...],
                 preferred_element_type=jnp.float32) + b1_ref[...]
    h1 = jnp.maximum(h1, 0.0)                      # act = ReLU
    acc_ref[...] += jnp.dot(h1.astype(jnp.bfloat16), w2_ref[...],
                            preferred_element_type=jnp.float32)

    @pl.when(k == pl.num_programs(1) - 1)
    def _finalize():
        out = x_ref[...].astype(jnp.float32) + acc_ref[...] + b2_ref[...]
        o_ref[...] = out.astype(o_ref.dtype)


def _spec(shape, index_map, n_buffers=None):
    """BlockSpec with optional pipeline depth; Buffered(1) for grid-constant operands."""
    if n_buffers is None:
        return pl.BlockSpec(shape, index_map)
    try:
        return pl.BlockSpec(shape, index_map, pipeline_mode=pl.Buffered(n_buffers))
    except TypeError:  # older jax without pipeline_mode kwarg
        return pl.BlockSpec(shape, index_map)


def _vmem_limit_bytes():
    try:
        cap = int(getattr(pltpu.get_tpu_info(), "vmem_capacity_bytes", 128 << 20))
    except Exception:
        cap = 128 << 20
    # ~78% of per-core VMEM (leaves headroom for compiler scratch / DMA descriptors),
    # capped at 100 MiB on 128-MiB chips, never below the 32-MiB scoped default.
    return max(32 << 20, min(int(cap * 0.78), 100 << 20))


def _pick_tk(f4, weight_bytes, weight_budget):
    # Keep both full bf16 weights VMEM-resident when they comfortably fit; otherwise
    # stream them along the hidden dimension in MXU/lane-friendly chunks.
    if weight_bytes <= weight_budget and f4 <= 8192:
        return f4
    for cand in (2048, 1024, 512, 256, 128):
        if f4 % cand == 0:
            return cand
    return f4


def _pick_tb(b, f, tk, vmem_limit):
    if b <= 256:
        return b
    # Rough per-batch-row VMEM bytes: double-buffered x/out tiles, bf16 h, f32 acc,
    # and the (tb, tk) f32 + bf16 chunk intermediates.
    per_row = 4 * f * 4 + 2 * f + 4 * f + 6 * tk
    tb = (vmem_limit // 2) // max(per_row, 1)
    tb = max(128, min(1024, (tb // 128) * 128))
    return min(tb, b)


def _init_linear(key, fan_in, fan_out):
    # Deterministic init mimicking torch.nn.Linear (uniform +-1/sqrt(fan_in)).
    kw, kb = jax.random.split(key)
    bound = 1.0 / jnp.sqrt(jnp.float32(fan_in))
    w = jax.random.uniform(kw, (fan_in, fan_out), jnp.float32, -bound, bound)
    b = jax.random.uniform(kb, (1, fan_out), jnp.float32, -bound, bound)
    return w, b


def make_block_params(key, features):
    k1, k2 = jax.random.split(key)
    w1, b1 = _init_linear(k1, features, 4 * features)
    w2, b2 = _init_linear(k2, 4 * features, features)
    gamma = jnp.ones((1, features), jnp.float32)
    beta = jnp.zeros((1, features), jnp.float32)
    # Weights shipped as bf16 (halves weight DMA bytes; MXU is bf16-native).
    # NOTE: bf16 weights deviate slightly from the f32 PyTorch module numerics.
    return (gamma, beta, w1.astype(jnp.bfloat16), b1, w2.astype(jnp.bfloat16), b2)


def mlp_resnet_block_forward(x, params, *, tb=None, tk=None):
    """Pallas forward: x + fc2(relu(fc1(layer_norm(x)))). Output dtype == x.dtype."""
    gamma, beta, w1, b1, w2, b2 = params
    b, f = x.shape
    f4 = 4 * f
    assert w1.shape == (f, f4) and w2.shape == (f4, f)

    vmem_limit = _vmem_limit_bytes()
    if tk is None:
        tk = _pick_tk(f4, w1.nbytes + w2.nbytes, vmem_limit // 3)
    if f4 % tk != 0:
        tk = f4
    if tb is None:
        tb = _pick_tb(b, f, tk, vmem_limit)

    nk = f4 // tk
    grid = (pl.cdiv(b, tb), nk)
    resident = nk == 1  # weight index maps constant over the whole grid -> single buffer

    in_specs = [
        _spec((tb, f), lambda i, k: (i, 0)),                          # x tile (streamed)
        _spec((1, f), lambda i, k: (0, 0), 1),                        # gamma (resident)
        _spec((1, f), lambda i, k: (0, 0), 1),                        # beta  (resident)
        _spec((f, tk), lambda i, k: (0, k), 1 if resident else None),  # w1 (bf16)
        _spec((1, tk), lambda i, k: (0, k), 1 if resident else None),  # b1
        _spec((tk, f), lambda i, k: (k, 0), 1 if resident else None),  # w2 (bf16)
        _spec((1, f), lambda i, k: (0, 0), 1),                        # b2    (resident)
    ]
    out_specs = pl.BlockSpec((tb, f), lambda i, k: (i, 0))

    cost = pl.CostEstimate(
        flops=int(4 * b * f * f4),
        transcendentals=int(b),  # one rsqrt per row
        bytes_accessed=int(x.nbytes + b * f * x.dtype.itemsize
                           + w1.nbytes + w2.nbytes
                           + gamma.nbytes + beta.nbytes + b1.nbytes + b2.nbytes),
    )

    return pl.pallas_call(
        _mlp_resnet_block_kernel,
        out_shape=jax.ShapeDtypeStruct((b, f), x.dtype),
        grid=grid,
        in_specs=in_specs,
        out_specs=out_specs,
        scratch_shapes=[
            pltpu.VMEM((tb, f), jnp.bfloat16),   # cached layer-normed activations
            pltpu.VMEM((tb, f), jnp.float32),    # fc2 accumulator
        ],
        compiler_params=pltpu.CompilerParams(
            dimension_semantics=("parallel", "arbitrary"),
            vmem_limit_bytes=vmem_limit,
        ),
        cost_estimate=cost,
    )(x, gamma, beta, w1, b1, w2, b2)


def _reference(x, params):
    """Pure-JAX reference with the same (bf16 matmul / f32 accumulate) numerics."""
    gamma, beta, w1, b1, w2, b2 = params
    xf = x.astype(jnp.float32)
    mean = jnp.mean(xf, axis=-1, keepdims=True)
    var = jnp.mean((xf - mean) ** 2, axis=-1, keepdims=True)
    h = (xf - mean) * jax.lax.rsqrt(var + LN_EPS)
    h = h * gamma + beta
    h1 = jnp.maximum(
        jnp.dot(h.astype(jnp.bfloat16), w1, preferred_element_type=jnp.float32) + b1, 0.0)
    h2 = jnp.dot(h1.astype(jnp.bfloat16), w2, preferred_element_type=jnp.float32) + b2
    return (xf + h2).astype(x.dtype)


if __name__ == "__main__":
    key = jax.random.PRNGKey(0)
    k_params, k_params2, k_x, k_x2 = jax.random.split(key, 4)

    # Case 1: F=32, single hidden chunk, resident weights; default and explicit tb.
    batch, features = 16, 32
    params = make_block_params(k_params, features)
    x = jax.random.normal(k_x, (batch, features), jnp.float32)
    ref = _reference(x, params)

    out = jax.block_until_ready(mlp_resnet_block_forward(x, params))
    assert out.shape == (batch, features) and out.dtype == x.dtype
    assert jnp.allclose(out, ref, atol=5e-3, rtol=5e-3)

    out_tiled = jax.block_until_ready(mlp_resnet_block_forward(x, params, tb=8))  # grid=(2,1)
    assert jnp.allclose(out_tiled, ref, atol=5e-3, rtol=5e-3)

    # Case 2: F=64 with forced hidden-dim chunking (tk=128 -> 2 chunks) to exercise
    # the streamed-weight / accumulator path.
    features2 = 64
    params2 = make_block_params(k_params2, features2)
    x2 = jax.random.normal(k_x2, (batch, features2), jnp.float32)
    ref2 = _reference(x2, params2)
    out2 = jax.block_until_ready(mlp_resnet_block_forward(x2, params2, tk=128))
    assert jnp.allclose(out2, ref2, atol=5e-3, rtol=5e-3)

    print("KERNEL_OK")
</pallas_src>

<mosaic_0001>
module attributes {stable_mosaic.version = 11 : i64} {
  func.func @_mlp_resnet_block_kernel(%arg0: i32, %arg1: i32, %arg2: memref<16x32xf32, #tpu.memory_space<vmem>>, %arg3: memref<1x32xf32, #tpu.memory_space<vmem>>, %arg4: memref<1x32xf32, #tpu.memory_space<vmem>>, %arg5: memref<32x128xbf16, #tpu.memory_space<vmem>>, %arg6: memref<1x128xf32, #tpu.memory_space<vmem>>, %arg7: memref<128x32xbf16, #tpu.memory_space<vmem>>, %arg8: memref<1x32xf32, #tpu.memory_space<vmem>>, %arg9: memref<16x32xf32, #tpu.memory_space<vmem>>, %arg10: memref<16x32xbf16, #tpu.memory_space<vmem>>, %arg11: memref<16x32xf32, #tpu.memory_space<vmem>>) attributes {dimension_semantics = [#tpu.dimension_semantics<parallel>, #tpu.dimension_semantics<arbitrary>], iteration_bounds = array<i64: 1, 1>, scalar_prefetch = 0 : i64, scratch_operands = 2 : i64, tpu.core_type = #tpu.core_type<tc>, window_params = [{transform_indices = @transform_0, window_bounds = array<i64: 16, 32>}, {pipeline_mode = #tpu.pipeline_mode<synchronous>, transform_indices = @transform_1, window_bounds = array<i64: 1, 32>}, {pipeline_mode = #tpu.pipeline_mode<synchronous>, transform_indices = @transform_2, window_bounds = array<i64: 1, 32>}, {pipeline_mode = #tpu.pipeline_mode<synchronous>, transform_indices = @transform_3, window_bounds = array<i64: 32, 128>}, {pipeline_mode = #tpu.pipeline_mode<synchronous>, transform_indices = @transform_4, window_bounds = array<i64: 1, 128>}, {pipeline_mode = #tpu.pipeline_mode<synchronous>, transform_indices = @transform_5, window_bounds = array<i64: 128, 32>}, {pipeline_mode = #tpu.pipeline_mode<synchronous>, transform_indices = @transform_6, window_bounds = array<i64: 1, 32>}, {transform_indices = @transform_7, window_bounds = array<i64: 16, 32>}]} {
    %c0_i32 = arith.constant 0 : i32
    %0 = arith.cmpi eq, %arg1, %c0_i32 : i32
    %1 = arith.extui %0 : i1 to i32
    %c0_i32_0 = arith.constant 0 : i32
    %2 = arith.cmpi ne, %1, %c0_i32_0 : i32
    scf.if %2 {
      %c0_16 = arith.constant 0 : index
      %c0_17 = arith.constant 0 : index
      %20 = vector.load %arg2[%c0_16, %c0_17] : memref<16x32xf32, #tpu.memory_space<vmem>>, vector<16x32xf32>
      %cst_18 = arith.constant dense<0.000000e+00> : vector<16xf32>
      %21 = vector.multi_reduction <add>, %20, %cst_18 [1] : vector<16x32xf32> to vector<16xf32>
      %22 = vector.shape_cast %21 : vector<16xf32> to vector<16x1xf32>
      %cst_19 = arith.constant 3.200000e+01 : f32
      %23 = vector.broadcast %cst_19 : f32 to vector<16x1xf32>
      %24 = arith.divf %22, %23 : vector<16x1xf32>
      %25 = vector.broadcast %24 : vector<16x1xf32> to vector<16x32xf32>
      %26 = arith.subf %20, %25 : vector<16x32xf32>
      %27 = arith.mulf %26, %26 : vector<16x32xf32>
      %cst_20 = arith.constant dense<0.000000e+00> : vector<16xf32>
      %28 = vector.multi_reduction <add>, %27, %cst_20 [1] : vector<16x32xf32> to vector<16xf32>
      %29 = vector.shape_cast %28 : vector<16xf32> to vector<16x1xf32>
      %cst_21 = arith.constant 3.200000e+01 : f32
      %30 = vector.broadcast %cst_21 : f32 to vector<16x1xf32>
      %31 = arith.divf %29, %30 : vector<16x1xf32>
      %cst_22 = arith.constant 9.99999974E-6 : f32
      %32 = vector.broadcast %cst_22 : f32 to vector<16x1xf32>
      %33 = arith.addf %31, %32 : vector<16x1xf32>
      %34 = math.rsqrt %33 : vector<16x1xf32>
      %35 = vector.broadcast %34 : vector<16x1xf32> to vector<16x32xf32>
      %36 = arith.mulf %26, %35 : vector<16x32xf32>
      %c0_23 = arith.constant 0 : index
      %c0_24 = arith.constant 0 : index
      %37 = vector.load %arg3[%c0_23, %c0_24] : memref<1x32xf32, #tpu.memory_space<vmem>>, vector<1x32xf32>
      %38 = vector.broadcast %37 : vector<1x32xf32> to vector<16x32xf32>
      %39 = arith.mulf %36, %38 : vector<16x32xf32>
      %c0_25 = arith.constant 0 : index
      %c0_26 = arith.constant 0 : index
      %40 = vector.load %arg4[%c0_25, %c0_26] : memref<1x32xf32, #tpu.memory_space<vmem>>, vector<1x32xf32>
      %41 = vector.broadcast %40 : vector<1x32xf32> to vector<16x32xf32>
      %42 = arith.addf %39, %41 : vector<16x32xf32>
      %43 = arith.truncf %42 : vector<16x32xf32> to vector<16x32xbf16>
      %c0_27 = arith.constant 0 : index
      %c0_28 = arith.constant 0 : index
      %44 = vector.load %arg10[%c0_27, %c0_28] : memref<16x32xbf16, #tpu.memory_space<vmem>>, vector<16x32xbf16>
      tpu.vector_store %arg10[%c0_27, %c0_28], %43 {strides = array<i32>} : memref<16x32xbf16, #tpu.memory_space<vmem>>, vector<16x32xbf16>,
      %cst_29 = arith.constant 0.000000e+00 : f32
      %45 = vector.broadcast %cst_29 : f32 to vector<16x32xf32>
      %c0_30 = arith.constant 0 : index
      %c0_31 = arith.constant 0 : index
      %46 = vector.load %arg11[%c0_30, %c0_31] : memref<16x32xf32, #tpu.memory_space<vmem>>, vector<16x32xf32>
      tpu.vector_store %arg11[%c0_30, %c0_31], %45 {strides = array<i32>} : memref<16x32xf32, #tpu.memory_space<vmem>>, vector<16x32xf32>,
    } else {
    }
    %c0 = arith.constant 0 : index
    %c0_1 = arith.constant 0 : index
    %3 = vector.load %arg10[%c0, %c0_1] : memref<16x32xbf16, #tpu.memory_space<vmem>>, vector<16x32xbf16>
    %c0_2 = arith.constant 0 : index
    %c0_3 = arith.constant 0 : index
    %4 = vector.load %arg5[%c0_2, %c0_3] : memref<32x128xbf16, #tpu.memory_space<vmem>>, vector<32x128xbf16>
    %cst = arith.constant dense<0.000000e+00> : vector<16x128xf32>
    %5 = tpu.matmul %3, %4, %cst {dimension_numbers = #tpu.dot_dimension_numbers<[1], [0], [0], [1], [0, 0, 1, 1], [], []>} : vector<16x32xbf16>, vector<32x128xbf16>, vector<16x128xf32> -> vector<16x128xf32>
    %c0_4 = arith.constant 0 : index
    %c0_5 = arith.constant 0 : index
    %6 = vector.load %arg6[%c0_4, %c0_5] : memref<1x128xf32, #tpu.memory_space<vmem>>, vector<1x128xf32>
    %7 = vector.broadcast %6 : vector<1x128xf32> to vector<16x128xf32>
    %8 = arith.addf %5, %7 : vector<16x128xf32>
    %cst_6 = arith.constant 0.000000e+00 : f32
    %9 = vector.broadcast %cst_6 : f32 to vector<16x128xf32>
    %10 = arith.maximumf %8, %9 : vector<16x128xf32>
    %c0_7 = arith.constant 0 : index
    %c0_8 = arith.constant 0 : index
    %11 = vector.load %arg11[%c0_7, %c0_8] : memref<16x32xf32, #tpu.memory_space<vmem>>, vector<16x32xf32>
    %12 = arith.truncf %10 : vector<16x128xf32> to vector<16x128xbf16>
    %c0_9 = arith.constant 0 : index
    %c0_10 = arith.constant 0 : index
    %13 = vector.load %arg7[%c0_9, %c0_10] : memref<128x32xbf16, #tpu.memory_space<vmem>>, vector<128x32xbf16>
    %cst_11 = arith.constant dense<0.000000e+00> : vector<16x32xf32>
    %14 = tpu.matmul %12, %13, %cst_11 {dimension_numbers = #tpu.dot_dimension_numbers<[1], [0], [0], [1], [0, 0, 1, 1], [], []>} : vector<16x128xbf16>, vector<128x32xbf16>, vector<16x32xf32> -> vector<16x32xf32>
    %15 = arith.addf %11, %14 : vector<16x32xf32>
    %c0_12 = arith.constant 0 : index
    %c0_13 = arith.constant 0 : index
    %16 = vector.load %arg11[%c0_12, %c0_13] : memref<16x32xf32, #tpu.memory_space<vmem>>, vector<16x32xf32>
    tpu.vector_store %arg11[%c0_12, %c0_13], %15 {strides = array<i32>} : memref<16x32xf32, #tpu.memory_space<vmem>>, vector<16x32xf32>,
    %c0_i32_14 = arith.constant 0 : i32
    %17 = arith.cmpi eq, %arg1, %c0_i32_14 : i32
    %18 = arith.extui %17 : i1 to i32
    %c0_i32_15 = arith.constant 0 : i32
    %19 = arith.cmpi ne, %18, %c0_i32_15 : i32
    scf.if %19 {
      %c0_16 = arith.constant 0 : index
      %c0_17 = arith.constant 0 : index
      %20 = vector.load %arg2[%c0_16, %c0_17] : memref<16x32xf32, #tpu.memory_space<vmem>>, vector<16x32xf32>
      %c0_18 = arith.constant 0 : index
      %c0_19 = arith.constant 0 : index
      %21 = vector.load %arg11[%c0_18, %c0_19] : memref<16x32xf32, #tpu.memory_space<vmem>>, vector<16x32xf32>
      %22 = arith.addf %20, %21 : vector<16x32xf32>
      %c0_20 = arith.constant 0 : index
      %c0_21 = arith.constant 0 : index
      %23 = vector.load %arg8[%c0_20, %c0_21] : memref<1x32xf32, #tpu.memory_space<vmem>>, vector<1x32xf32>
      %24 = vector.broadcast %23 : vector<1x32xf32> to vector<16x32xf32>
      %25 = arith.addf %22, %24 : vector<16x32xf32>
      %c0_22 = arith.constant 0 : index
      %c0_23 = arith.constant 0 : index
      %26 = vector.load %arg9[%c0_22, %c0_23] : memref<16x32xf32, #tpu.memory_space<vmem>>, vector<16x32xf32>
      tpu.vector_store %arg9[%c0_22, %c0_23], %25 {strides = array<i32>} : memref<16x32xf32, #tpu.memory_space<vmem>>, vector<16x32xf32>,
    } else {
    }
    return
  }
  func.func @transform_0(%arg0: i32, %arg1: i32) -> (i32, i32) {
    %c0_i32 = arith.constant 0 : i32
    %c0_i32_0 = arith.constant 0 : i32
    return %arg0, %c0_i32 : i32, i32
  }
  func.func @transform_1(%arg0: i32, %arg1: i32) -> (i32, i32) {
    %c0_i32 = arith.constant 0 : i32
    %c0_i32_0 = arith.constant 0 : i32
    %c0_i32_1 = arith.constant 0 : i32
    return %c0_i32, %c0_i32_0 : i32, i32
  }
  func.func @transform_2(%arg0: i32, %arg1: i32) -> (i32, i32) {
    %c0_i32 = arith.constant 0 : i32
    %c0_i32_0 = arith.constant 0 : i32
    %c0_i32_1 = arith.constant 0 : i32
    return %c0_i32, %c0_i32_0 : i32, i32
  }
  func.func @transform_3(%arg0: i32, %arg1: i32) -> (i32, i32) {
    %c0_i32 = arith.constant 0 : i32
    %c0_i32_0 = arith.constant 0 : i32
    return %c0_i32, %arg1 : i32, i32
  }
  func.func @transform_4(%arg0: i32, %arg1: i32) -> (i32, i32) {
    %c0_i32 = arith.constant 0 : i32
    %c0_i32_0 = arith.constant 0 : i32
    return %c0_i32, %arg1 : i32, i32
  }
  func.func @transform_5(%arg0: i32, %arg1: i32) -> (i32, i32) {
    %c0_i32 = arith.constant 0 : i32
    %c0_i32_0 = arith.constant 0 : i32
    return %arg1, %c0_i32 : i32, i32
  }
  func.func @transform_6(%arg0: i32, %arg1: i32) -> (i32, i32) {
    %c0_i32 = arith.constant 0 : i32
    %c0_i32_0 = arith.constant 0 : i32
    %c0_i32_1 = arith.constant 0 : i32
    return %c0_i32, %c0_i32_0 : i32, i32
  }
  func.func @transform_7(%arg0: i32, %arg1: i32) -> (i32, i32) {
    %c0_i32 = arith.constant 0 : i32
    %c0_i32_0 = arith.constant 0 : i32
    return %arg0, %c0_i32 : i32, i32
  }
}

</mosaic_0001>

<llo_original>
// kernel: tpu_custom_call.1
$region0: #{tpu_custom_call.1}
  #allocation0 [shape = 'u32[]', space=smem, size = 0x4, offset = 0x4, fixed_abs, tag = 'smem constant byte address 0x4 - core index']
  #allocation1 [shape = 'u32[144,128]{1,0:T(1,128)}', space=vmem, size = 0x12000, scoped, tag = 'internal scratch']
  #allocation2 [shape = 'bf16[16,32]{1,0:T(8,128)(2,1)}', space=vmem, size = 0x1000, scoped, tag = 'scratch operand']
  #allocation3 [shape = 'f32[16,32]{1,0:T(8,128)}', space=vmem, size = 0x2000, scoped, tag = 'scratch operand']
  %s0 = inlined_call_operand.vmem [shape: f32[16,32], index: 0, kind: input, shape index: {}]
  %s1 = inlined_call_operand.vmem [shape: f32[1,32], index: 1, kind: input, shape index: {}]
  %s2 = inlined_call_operand.vmem [shape: f32[1,32], index: 2, kind: input, shape index: {}]
  %s3 = inlined_call_operand.vmem [shape: bf16[32,128], index: 3, kind: input, shape index: {}]
  %s4 = inlined_call_operand.vmem [shape: f32[1,128], index: 4, kind: input, shape index: {}]
  %s5 = inlined_call_operand.vmem [shape: bf16[128,32], index: 5, kind: input, shape index: {}]
  %s6 = inlined_call_operand.vmem [shape: f32[1,32], index: 6, kind: input, shape index: {}]
  %s7 = inlined_call_operand.hbm [shape: f32[16,32], index: 7, kind: output, shape index: {}]
  %s8 = sld [smem:[#allocation0]]
  $region46: #{tpu_custom_call.1} parent=0
    _
  %s10 = ssub.s32 1, %s8
  %s11 = scalar_select 0, %s10, %s8
  $region1: #{tpu_custom_call.1} parent=0
    #allocation4 [shape = 'u8[8192]{0}', space=vmem, size = 0x2000, scoped, tag = 'output window, operand 0, single buffered']
    #allocation5 [shape = 's32[1]{0}', space=sflag, size = 0x4, scoped, tag = 'scoped memory for tpu_custom_call.1']
    %12 = vsyncpa [#allocation5], 0
    // Predicated region
    $region2: #{tpu_custom_call.1} parent=1 // pred_check
      _
    $region3: #{tpu_custom_call.1} parent=1 // pred_check_branch
      %14 = sbr.rel (0) target = $region5
    $region4: #{tpu_custom_call.1} parent=1 // pred_region
      _
    $region5: #{tpu_custom_call.1} parent=1 // pred_fallthru
      _
    // Predicated region
    $region6: #{tpu_custom_call.1} parent=1 // pred_check
      _
    $region7: #{tpu_custom_call.1} parent=1 // pred_check_branch
      %16 = sbr.rel (0) target = $region9
    $region8: #{tpu_custom_call.1} parent=1 // pred_region
      _
    $region9: #{tpu_custom_call.1} parent=1 // pred_fallthru
      _
    // Predicated region
    $region10: #{tpu_custom_call.1} parent=1 // pred_check
      _
    $region11: #{tpu_custom_call.1} parent=1 // pred_check_branch
      %18 = sbr.rel (0) target = $region13
    $region12: #{tpu_custom_call.1} parent=1 // pred_region
      _
    $region13: #{tpu_custom_call.1} parent=1 // pred_fallthru
      _
    // Predicated region
    $region14: #{tpu_custom_call.1} parent=1 // pred_check
      _
    $region15: #{tpu_custom_call.1} parent=1 // pred_check_branch
      %20 = sbr.rel (0) target = $region17
    $region16: #{tpu_custom_call.1} parent=1 // pred_region
      _
    $region17: #{tpu_custom_call.1} parent=1 // pred_fallthru
      _
    // Predicated region
    $region18: #{tpu_custom_call.1} parent=1 // pred_check
      _
    $region19: #{tpu_custom_call.1} parent=1 // pred_check_branch
      %22 = sbr.rel (0) target = $region21
    $region20: #{tpu_custom_call.1} parent=1 // pred_region
      _
    $region21: #{tpu_custom_call.1} parent=1 // pred_fallthru
      _
    // Predicated region
    $region22: #{tpu_custom_call.1} parent=1 // pred_check
      _
    $region23: #{tpu_custom_call.1} parent=1 // pred_check_branch
      %24 = sbr.rel (0) target = $region25
    $region24: #{tpu_custom_call.1} parent=1 // pred_region
      _
    $region25: #{tpu_custom_call.1} parent=1 // pred_fallthru
      _
    // Predicated region
    $region26: #{tpu_custom_call.1} parent=1 // pred_check
      _
    $region27: #{tpu_custom_call.1} parent=1 // pred_check_branch
      %26 = sbr.rel (0) target = $region29
    $region28: #{tpu_custom_call.1} parent=1 // pred_region
      _
    $region29: #{tpu_custom_call.1} parent=1 // pred_fallthru
      _
    %p28 = scmp.eq.s32.totalorder 0, 0
    // Predicated region
    $region30: #{tpu_custom_call.1} parent=1 // pred_check
      %p29 = pneg %p28
    $region31: #{tpu_custom_call.1} parent=1 // pred_check_branch
      %31 = sbr.rel (%p29) target = $region33
    $region32: #{tpu_custom_call.1} parent=1 // pred_region
      %v32 = vld [vmem:[%s0] sm:$0xff]
      %v33 = vld [vmem:[%s0 + $0x8] sm:$0xff]
      %vm34 = vcmask 261120
      %v35 = vsel %vm34, %v32, 0.0
      %36 = vadd.xlane.f32.xlu0 %v35
      %v37 = vpop.xlane.xlu0 %36
      %v38 = vsel %vm34, %v33, 0.0
      %39 = vadd.xlane.f32.xlu0 %v38
      %v40 = vpop.xlane.xlu0 %39
      %v41 = vrcp.pop 32.0
      %v42 = vmul.f32 %v37, %v41
      %v43 = vmul.f32 %v40, %v41
      %v44 = vsub.f32 %v32, %v42
      %v45 = vsub.f32 %v33, %v43
      %v46 = vmul.f32 %v44, %v44
      %v47 = vmul.f32 %v45, %v45
      %v48 = vsel %vm34, %v46, 0.0
      %49 = vadd.xlane.f32.xlu0 %v48
      %v50 = vpop.xlane.xlu0 %49
      %v51 = vsel %vm34, %v47, 0.0
      %52 = vadd.xlane.f32.xlu0 %v51
      %v53 = vpop.xlane.xlu0 %52
      %v54 = vmul.f32 %v50, %v41
      %v55 = vmul.f32 %v53, %v41
      %v56 = vadd.f32 %v54, 1e-05
      %v57 = vadd.f32 %v55, 1e-05
      %v58 = vrsqrt.pop %v56
      %v59 = vrsqrt.pop %v57
      %v60 = vmul.f32 %v44, %v58
      %v61 = vmul.f32 %v45, %v59
      %v62 = vld [vmem:[%s1] sm:$0x1]
      %v64 = vlaneseq
      %v65 = vshrl.u32 %v64, 7
      %v66 = vsub.s32 0, %v65
      %v67 = vrot.slane %v62, %v66
      %v69 = vmul.f32 %v60, %v67
      %v70 = vmul.f32 %v61, %v67
      %v71 = vld [vmem:[%s2] sm:$0x1]
      %v73 = vlaneseq
      %v74 = vshrl.u32 %v73, 7
      %v75 = vsub.s32 0, %v74
      %v76 = vrot.slane %v71, %v75
      %v78 = vadd.f32 %v69, %v76
      %v79 = vadd.f32 %v70, %v76
      %v80 = vpack.c.bf16 %v79, %v78
      %v82 = vunpack.c.l.b16 %v80
      %v83 = vunpack.c.h.b16 %v80
      %v84 = vpack.c.b16 %v82, %v82
      %v85 = vpack.c.b16 %v83, %v83
      %vm88 = vcmask 257024
      %89 = vst.msk [vmem:[#allocation2] sm:$0xf] %vm88, %v84
      %90 = vst.msk [vmem:[#allocation2 + $0x4] sm:$0xf] %vm88, %v85
      %91 = vst.msk [vmem:[#allocation3] sm:$0xff] %vm34, 0.0
      %92 = vst.msk [vmem:[#allocation3 + $0x8] sm:$0xff] %vm34, 0.0
    $region33: #{tpu_custom_call.1} parent=1 // pred_fallthru
      _
    %v93 = vld [vmem:[#allocation2] sm:$0xf]
    %v94 = vld [vmem:[#allocation2 + $0x4] sm:$0xf]
    %v95 = vld [vmem:[%s3] sm:$0xf]
    %v96 = vld [vmem:[%s3 + $0x4] sm:$0xf]
    %v97 = vld [vmem:[%s3 + $0x8] sm:$0xf]
    %v98 = vld [vmem:[%s3 + $0xc] sm:$0xf]
    %v99 = vld [vmem:[%s4] sm:$0x1]
    %v101 = vlaneseq
    %v102 = vshrl.u32 %v101, 7
    %v103 = vsub.s32 0, %v102
    %v104 = vrot.slane %v99, %v103
    %v108 = vunpack.c.l.b16 %v93
    %v109 = vunpack.c.l.b16 %v94
    %v110 = vpack.c.b16 %v109, %v108
    %v115 = vunpack.c.l.b16 %v95
    %v116 = vunpack.c.l.b16 %v96
    %v117 = vunpack.c.l.b16 %v97
    %v118 = vunpack.c.l.b16 %v98
    %v119 = vpack.c.b16 %v116, %v115
    %v120 = vpack.c.b16 %v118, %v117
    %vm123 = vcmask 261120
    %v125 = vsel %vm123, %v110, 0
    %127 = vmatprep.subr.bf16.mxu0 0
    %128 = vmatpush1.bf16.msra.mxu0 0
    %129 = vmatprep.subr.bf16.mxu0 0
    %130 = vmatpush1.bf16.msra.mxu0 0
    %131 = vmatprep.subr.bf16.mxu0 0
    %132 = vmatpush1.bf16.msra.mxu0 0
    %133 = vmatprep.subr.bf16.mxu0 0
    %134 = vmatpush1.bf16.msra.mxu0 0
    %135 = vmatprep.subr.bf16.mxu0 0
    %136 = vmatpush1.bf16.msra.mxu0 0
    %137 = vmatprep.subr.bf16.mxu0 0
    %138 = vmatpush1.bf16.msra.mxu0 0
    %139 = vmatprep.subr.bf16.mxu0 0
    %140 = vmatpush1.bf16.msra.mxu0 %v120
    %141 = vmatprep.subr.bf16.mxu0 0
    %142 = vmatpush1.bf16.msra.mxu0 %v119
    %143 = vmatprep.subr.bf16.mxu0 0
    %144 = vmatpush2.bf16.msra.mxu0 0
    %145 = vmatprep.subr.bf16.mxu0 0
    %146 = vmatpush2.bf16.msra.mxu0 0
    %147 = vmatprep.subr.bf16.mxu0 0
    %148 = vmatpush2.bf16.msra.mxu0 0
    %149 = vmatprep.subr.bf16.mxu0 0
    %150 = vmatpush2.bf16.msra.mxu0 0
    %151 = vmatprep.subr.bf16.mxu0 0
    %152 = vmatpush2.bf16.msra.mxu0 0
    %153 = vmatprep.subr.bf16.mxu0 0
    %154 = vmatpush2.bf16.msra.mxu0 0
    %155 = vmatprep.subr.bf16.mxu0 0
    %156 = vmatpush2.bf16.msra.mxu0 0
    %157 = vmatprep.subr.bf16.mxu0 0
    %158 = vmatpush2.bf16.msra.mxu0 0
    %159 = vmatprep.mubr.bf16.mxu0 0
    %160 = vmatmul.mubr.bf16.gmra.mxu0 %v125
    %v161 = vpop.f32.mrf.mxu0
    %v162 = vadd.f32 %v104, %v161
    %v163 = vpop.f32.mrf.mxu0
    %v164 = vpop.f32.mrf.mxu0
    %v165 = vadd.f32 %v104, %v164
    %v166 = vpop.f32.mrf.mxu0
    %167 = vdwg.mxu0
    %v168 = vmax.f32 %v162, 0.0
    %v169 = vmax.f32 %v165, 0.0
    %v170 = vld [vmem:[#allocation3] sm:$0xff]
    %v171 = vld [vmem:[#allocation3 + $0x8] sm:$0xff]
    %v172 = vpack.c.bf16 %v169, %v168
    %v173 = vld [vmem:[%s5] sm:$0xf]
    %v174 = vld [vmem:[%s5 + $0x4] sm:$0xf]
    %v175 = vld [vmem:[%s5 + $0x8] sm:$0xf]
    %v176 = vld [vmem:[%s5 + $0xc] sm:$0xf]
    %v177 = vld [vmem:[%s5 + $0x10] sm:$0xf]
    %v178 = vld [vmem:[%s5 + $0x14] sm:$0xf]
    %v179 = vld [vmem:[%s5 + $0x18] sm:$0xf]
    %v180 = vld [vmem:[%s5 + $0x1c] sm:$0xf]
    %v181 = vld [vmem:[%s5 + $0x20] sm:$0xf]
    %v182 = vld [vmem:[%s5 + $0x24] sm:$0xf]
    %v183 = vld [vmem:[%s5 + $0x28] sm:$0xf]
    %v184 = vld [vmem:[%s5 + $0x2c] sm:$0xf]
    %v185 = vld [vmem:[%s5 + $0x30] sm:$0xf]
    %v186 = vld [vmem:[%s5 + $0x34] sm:$0xf]
    %v187 = vld [vmem:[%s5 + $0x38] sm:$0xf]
    %v188 = vld [vmem:[%s5 + $0x3c] sm:$0xf]
    %v205 = vunpack.c.l.b16 %v173
    %v206 = vunpack.c.l.b16 %v174
    %v207 = vunpack.c.l.b16 %v175
    %v208 = vunpack.c.l.b16 %v176
    %v209 = vunpack.c.l.b16 %v177
    %v210 = vunpack.c.l.b16 %v178
    %v211 = vunpack.c.l.b16 %v179
    %v212 = vunpack.c.l.b16 %v180
    %v213 = vunpack.c.l.b16 %v181
    %v214 = vunpack.c.l.b16 %v182
    %v215 = vunpack.c.l.b16 %v183
    %v216 = vunpack.c.l.b16 %v184
    %v217 = vunpack.c.l.b16 %v185
    %v218 = vunpack.c.l.b16 %v186
    %v219 = vunpack.c.l.b16 %v187
    %v220 = vunpack.c.l.b16 %v188
    %v221 = vpack.c.b16 %v206, %v205
    %v222 = vpack.c.b16 %v208, %v207
    %v223 = vpack.c.b16 %v210, %v209
    %v224 = vpack.c.b16 %v212, %v211
    %v225 = vpack.c.b16 %v214, %v213
    %v226 = vpack.c.b16 %v216, %v215
    %v227 = vpack.c.b16 %v218, %v217
    %v228 = vpack.c.b16 %v220, %v219
    %237 = vmatprep.subr.bf16.mxu0 0
    %238 = vmatpush1.bf16.msra.mxu0 %v228
    %239 = vmatprep.subr.bf16.mxu0 0
    %240 = vmatpush1.bf16.msra.mxu0 %v227
    %241 = vmatprep.subr.bf16.mxu0 0
    %242 = vmatpush1.bf16.msra.mxu0 %v226
    %243 = vmatprep.subr.bf16.mxu0 0
    %244 = vmatpush1.bf16.msra.mxu0 %v225
    %245 = vmatprep.subr.bf16.mxu0 0
    %246 = vmatpush1.bf16.msra.mxu0 %v224
    %247 = vmatprep.subr.bf16.mxu0 0
    %248 = vmatpush1.bf16.msra.mxu0 %v223
    %249 = vmatprep.subr.bf16.mxu0 0
    %250 = vmatpush1.bf16.msra.mxu0 %v222
    %251 = vmatprep.subr.bf16.mxu0 0
    %252 = vmatpush1.bf16.msra.mxu0 %v221
    %253 = vmatprep.subr.bf16.mxu0 0
    %254 = vmatpush2.bf16.msra.mxu0 0
    %255 = vmatprep.subr.bf16.mxu0 0
    %256 = vmatpush2.bf16.msra.mxu0 0
    %257 = vmatprep.subr.bf16.mxu0 0
    %258 = vmatpush2.bf16.msra.mxu0 0
    %259 = vmatprep.subr.bf16.mxu0 0
    %260 = vmatpush2.bf16.msra.mxu0 0
    %261 = vmatprep.subr.bf16.mxu0 0
    %262 = vmatpush2.bf16.msra.mxu0 0
    %263 = vmatprep.subr.bf16.mxu0 0
    %264 = vmatpush2.bf16.msra.mxu0 0
    %265 = vmatprep.subr.bf16.mxu0 0
    %266 = vmatpush2.bf16.msra.mxu0 0
    %267 = vmatprep.subr.bf16.mxu0 0
    %268 = vmatpush2.bf16.msra.mxu0 0
    %269 = vmatprep.mubr.bf16.mxu0 0
    %270 = vmatmul.mubr.bf16.gmra.mxu0 %v172
    %v271 = vpop.f32.mrf.mxu0
    %v272 = vadd.f32 0.0, %v271
    %v273 = vpop.f32.mrf.mxu0
    %v274 = vpop.f32.mrf.mxu0
    %v275 = vadd.f32 0.0, %v274
    %v276 = vpop.f32.mrf.mxu0
    %277 = vdwg.mxu0
    %v278 = vadd.f32 %v170, %v272
    %v279 = vadd.f32 %v171, %v275
    %280 = vst.msk [vmem:[#allocation3] sm:$0xff] %vm123, %v278
    %281 = vst.msk [vmem:[#allocation3 + $0x8] sm:$0xff] %vm123, %v279
    // Predicated region
    $region34: #{tpu_custom_call.1} parent=1 // pred_check
      %p282 = pneg %p28
    $region35: #{tpu_custom_call.1} parent=1 // pred_check_branch
      %284 = sbr.rel (%p282) target = $region37
    $region36: #{tpu_custom_call.1} parent=1 // pred_region
      %v285 = vld [vmem:[%s0] sm:$0xff]
      %v286 = vld [vmem:[%s0 + $0x8] sm:$0xff]
      %v287 = vld [vmem:[#allocation3] sm:$0xff]
      %v288 = vld [vmem:[#allocation3 + $0x8] sm:$0xff]
      %v289 = vadd.f32 %v285, %v287
      %v290 = vadd.f32 %v286, %v288
      %v291 = vld [vmem:[%s6] sm:$0x1]
      %v293 = vlaneseq
      %v294 = vshrl.u32 %v293, 7
      %v295 = vsub.s32 0, %v294
      %v296 = vrot.slane %v291, %v295
      %v298 = vadd.f32 %v289, %v296
      %v299 = vadd.f32 %v290, %v296
      %300 = vst.msk [vmem:[#allocation4] sm:$0xff] %vm123, %v298
      %301 = vst.msk [vmem:[#allocation4 + $0x8] sm:$0xff] %vm123, %v299
    $region37: #{tpu_custom_call.1} parent=1 // pred_fallthru
      _
    // Predicated region
    $region38: #{tpu_custom_call.1} parent=1 // pred_check
      _
    $region39: #{tpu_custom_call.1} parent=1 // pred_check_branch
      %303 = sbr.rel (0) target = $region41
    $region40: #{tpu_custom_call.1} parent=1 // pred_region
      %s305 = ssub.s32 256, 256
      %306 = vsyncadd [#allocation5], %s305
      %s307 = sshll.u32 [#allocation4], 4
      %s308 = int_to_ptr.vmem [resolvable:$true] %s307
      %313 = dma.vmem_to_hbm [thread:$0]  %s308, 256, %s7, [#allocation5], 128, 128, 8
    $region41: #{tpu_custom_call.1} parent=1 // pred_fallthru
      _
    // Predicated region
    $region42: #{tpu_custom_call.1} parent=1 // pred_check
      _
    $region43: #{tpu_custom_call.1} parent=1 // pred_check_branch
      %315 = sbr.rel (0) target = $region45
    $region44: #{tpu_custom_call.1} parent=1 // pred_region
      %316 = dma.done [#allocation5], 256
    $region45: #{tpu_custom_call.1} parent=1 // pred_fallthru
      _
    %317 = vsyncpa [#allocation5], 1

</llo_original>
